<compile_context>
chip_gen: v5e
topology: v5e:2x2
jax: 0.10.0
libtpu: 0.0.40
codegen_flags: <defaults>
</compile_context>

<pallas_src>
import functools

import jax
import jax.numpy as jnp
from jax.experimental import pallas as pl
from jax.experimental.pallas import tpu as pltpu

LANE = 128


def _channel_attention_kernel(x_ref, w1_ref, w2_ref, out_ref, sum_acc, max_acc,
                              *, hw, s_chunk, acc_w, need_mask):
    # x_ref   : (C, S_CHUNK)  current spatial chunk of one batch element
    # w1_ref  : (Cr, C)       first 1x1 conv weight (torch layout, squeezed)
    # w2_ref  : (C, Cr)       second 1x1 conv weight
    # out_ref : (C, 1)        sigmoid(channel attention) for this batch element
    # sum_acc / max_acc : (C, acc_w) f32 lane-preserving accumulators
    k = pl.program_id(1)
    n_k = pl.num_programs(1)

    @pl.when(k == 0)
    def _init():
        sum_acc[...] = jnp.zeros(sum_acc.shape, dtype=sum_acc.dtype)
        max_acc[...] = jnp.full(max_acc.shape, -jnp.inf, dtype=max_acc.dtype)

    n_slices = s_chunk // acc_w
    if need_mask:
        lane_ids = jax.lax.broadcasted_iota(jnp.int32, (sum_acc.shape[0], acc_w), 1)
        chunk_base = k * s_chunk

    # Fold the chunk into the accumulators slice-by-slice: pure VPU work, no
    # per-step cross-lane (XLU) reduction and no full-tile f32 materialization.
    for j in range(n_slices):
        xs = x_ref[:, j * acc_w:(j + 1) * acc_w].astype(jnp.float32)
        if need_mask:
            valid = (chunk_base + j * acc_w + lane_ids) < hw
            xs_sum = jnp.where(valid, xs, 0.0)
            xs_max = jnp.where(valid, xs, -jnp.inf)
        else:
            xs_sum = xs
            xs_max = xs
        sum_acc[...] += xs_sum
        max_acc[...] = jnp.maximum(max_acc[...], xs_max)

    @pl.when(k == n_k - 1)
    def _finalize():
        # Single cross-lane reduce of the (C, acc_w) accumulators.
        avg = jnp.sum(sum_acc[...], axis=-1, keepdims=True) * jnp.float32(1.0 / hw)  # (C, 1)
        mx = jnp.max(max_acc[...], axis=-1, keepdims=True)                           # (C, 1)

        # Pack avg|max as the two columns of a single operand -> one FC pass.
        col = jax.lax.broadcasted_iota(jnp.int32, (avg.shape[0], 2), 1)
        v = jnp.where(col == 0, avg, mx)                                              # (C, 2)

        w1 = w1_ref[...].astype(jnp.float32)   # (Cr, C)
        w2 = w2_ref[...].astype(jnp.float32)   # (C, Cr)
        h = jnp.maximum(jnp.dot(w1, v, preferred_element_type=jnp.float32), 0.0)      # (Cr, 2)
        y = jnp.dot(w2, h, preferred_element_type=jnp.float32)                        # (C, 2)
        out = y[:, 0:1] + y[:, 1:2]                                                   # (C, 1)
        out_ref[...] = jax.nn.sigmoid(out).astype(out_ref.dtype)


def _choose_spatial_chunk(hw, c, itemsize, s_chunk=None):
    """Pick a lane-aligned spatial chunk sized for ~6 MiB per (C, S_CHUNK) tile."""
    if s_chunk is not None:
        return s_chunk
    if hw <= LANE:
        return hw  # single full-extent block (always legal)
    target_bytes = 6 * 1024 * 1024
    max_lanes = max(LANE, (target_bytes // max(1, c * itemsize)) // LANE * LANE)
    return min(max_lanes, (hw // LANE) * LANE)


def channel_attention(x, w1, w2, *, s_chunk=None):
    """x: (B, C, H, W) NCHW; w1: (Cr, C, 1, 1); w2: (C, Cr, 1, 1) torch conv weights."""
    B, C, H, W = x.shape
    Cr = w1.shape[0]
    HW = H * W

    x3 = x.reshape(B, C, HW)
    w1m = w1.reshape(Cr, C)
    w2m = w2.reshape(C, Cr)

    s_chunk = _choose_spatial_chunk(HW, C, x.dtype.itemsize, s_chunk)
    assert s_chunk == HW or s_chunk % LANE == 0, (
        "s_chunk must be a multiple of 128 or equal to H*W")
    n_chunks = pl.cdiv(HW, s_chunk)
    need_mask = (HW % s_chunk) != 0
    acc_w = s_chunk if s_chunk < LANE else LANE

    kernel = functools.partial(
        _channel_attention_kernel,
        hw=HW, s_chunk=s_chunk, acc_w=acc_w, need_mask=need_mask)

    out = pl.pallas_call(
        kernel,
        out_shape=jax.ShapeDtypeStruct((B, C, 1), jnp.float32),
        grid_spec=pltpu.PrefetchScalarGridSpec(
            num_scalar_prefetch=0,
            grid=(B, n_chunks),
            in_specs=[
                # Spatial chunk of one batch element (batch dim squeezed).
                pl.BlockSpec((None, C, s_chunk), lambda b, k: (b, 0, k)),
                # Weights: constant block index -> resident in VMEM, no re-DMA.
                pl.BlockSpec((Cr, C), lambda b, k: (0, 0)),
                pl.BlockSpec((C, Cr), lambda b, k: (0, 0)),
            ],
            out_specs=pl.BlockSpec((None, C, 1), lambda b, k: (b, 0, 0)),
            scratch_shapes=[
                pltpu.VMEM((C, acc_w), jnp.float32),  # running sum
                pltpu.VMEM((C, acc_w), jnp.float32),  # running max
            ],
        ),
        compiler_params=pltpu.CompilerParams(
            dimension_semantics=("parallel", "arbitrary"),
            vmem_limit_bytes=32 * 1024 * 1024,
        ),
    )(x3, w1m, w2m)

    return out.reshape(B, C, 1, 1)


def reference(x, w1, w2):
    B, C, H, W = x.shape
    Cr = w1.shape[0]
    avg = jnp.mean(x, axis=(2, 3))
    mx = jnp.max(x, axis=(2, 3))
    w1m = w1.reshape(Cr, C)
    w2m = w2.reshape(C, Cr)

    def fc(v):
        h = jnp.maximum(v @ w1m.T, 0.0)
        return h @ w2m.T

    return jax.nn.sigmoid(fc(avg) + fc(mx)).reshape(B, C, 1, 1)


if __name__ == "__main__":
    key = jax.random.PRNGKey(0)
    kx, k1, k2, kx2 = jax.random.split(key, 4)

    ratio = 16
    B, C, H, W = 2, 32, 16, 16   # in_planes must be >= ratio for a non-empty bottleneck
    Cr = C // ratio

    x = jax.random.normal(kx, (B, C, H, W), dtype=jnp.float32)
    w1 = jax.random.normal(k1, (Cr, C, 1, 1), dtype=jnp.float32) * (1.0 / jnp.sqrt(C))
    w2 = jax.random.normal(k2, (C, Cr, 1, 1), dtype=jnp.float32) * (1.0 / jnp.sqrt(Cr))

    # Case 1: aligned spatial size, multi-chunk reduction (2 chunks of 128).
    out = jax.block_until_ready(channel_attention(x, w1, w2, s_chunk=128))
    ref = reference(x, w1, w2)
    assert out.shape == (B, C, 1, 1)
    assert jnp.allclose(out, ref, atol=1e-5, rtol=1e-5), "mismatch (aligned case)"

    # Case 2: ragged spatial size (20x20 = 400) -> masked tail chunk.
    x2 = jax.random.normal(kx2, (B, C, 20, 20), dtype=jnp.float32)
    out2 = jax.block_until_ready(channel_attention(x2, w1, w2, s_chunk=256))
    ref2 = reference(x2, w1, w2)
    assert jnp.allclose(out2, ref2, atol=1e-5, rtol=1e-5), "mismatch (masked tail case)"

    # Case 3: automatic chunk selection (single full chunk at this size).
    out3 = jax.block_until_ready(channel_attention(x, w1, w2))
    assert jnp.allclose(out3, ref, atol=1e-5, rtol=1e-5), "mismatch (auto chunk case)"

    print("KERNEL_OK")
</pallas_src>

<mosaic_0001>
module attributes {stable_mosaic.version = 11 : i64} {
  func.func @_channel_attention_kernel(%arg0: i32, %arg1: i32, %arg2: memref<1x32x128xf32, #tpu.memory_space<vmem>>, %arg3: memref<2x32xf32, #tpu.memory_space<vmem>>, %arg4: memref<32x2xf32, #tpu.memory_space<vmem>>, %arg5: memref<1x32x1xf32, #tpu.memory_space<vmem>>, %arg6: memref<32x128xf32, #tpu.memory_space<vmem>>, %arg7: memref<32x128xf32, #tpu.memory_space<vmem>>) attributes {dimension_semantics = [#tpu.dimension_semantics<parallel>, #tpu.dimension_semantics<arbitrary>], iteration_bounds = array<i64: 2, 2>, scalar_prefetch = 0 : i64, scratch_operands = 2 : i64, tpu.core_type = #tpu.core_type<tc>, window_params = [{transform_indices = @transform_0, window_bounds = array<i64: 1, 32, 128>}, {pipeline_mode = #tpu.pipeline_mode<synchronous>, transform_indices = @transform_1, window_bounds = array<i64: 2, 32>}, {pipeline_mode = #tpu.pipeline_mode<synchronous>, transform_indices = @transform_2, window_bounds = array<i64: 32, 2>}, {transform_indices = @transform_3, window_bounds = array<i64: 1, 32, 1>}]} {
    %c0_i32 = arith.constant 0 : i32
    %0 = arith.cmpi eq, %arg1, %c0_i32 : i32
    %1 = arith.extui %0 : i1 to i32
    %c0_i32_0 = arith.constant 0 : i32
    %2 = arith.cmpi ne, %1, %c0_i32_0 : i32
    scf.if %2 {
      %cst = arith.constant 0.000000e+00 : f32
      %14 = vector.broadcast %cst : f32 to vector<32x128xf32>
      %c0_12 = arith.constant 0 : index
      %c0_13 = arith.constant 0 : index
      %15 = vector.load %arg6[%c0_12, %c0_13] : memref<32x128xf32, #tpu.memory_space<vmem>>, vector<32x128xf32>
      tpu.vector_store %arg6[%c0_12, %c0_13], %14 {strides = array<i32>} : memref<32x128xf32, #tpu.memory_space<vmem>>, vector<32x128xf32>,
      %cst_14 = arith.constant 0xFF800000 : f32
      %16 = vector.broadcast %cst_14 : f32 to vector<32x128xf32>
      %c0_15 = arith.constant 0 : index
      %c0_16 = arith.constant 0 : index
      %17 = vector.load %arg7[%c0_15, %c0_16] : memref<32x128xf32, #tpu.memory_space<vmem>>, vector<32x128xf32>
      tpu.vector_store %arg7[%c0_15, %c0_16], %16 {strides = array<i32>} : memref<32x128xf32, #tpu.memory_space<vmem>>, vector<32x128xf32>,
    } else {
    }
    %c0 = arith.constant 0 : index
    %c0_1 = arith.constant 0 : index
    %c0_2 = arith.constant 0 : index
    %3 = vector.load %arg2[%c0, %c0_1, %c0_2] : memref<1x32x128xf32, #tpu.memory_space<vmem>>, vector<1x32x128xf32>
    %4 = vector.shape_cast %3 : vector<1x32x128xf32> to vector<32x128xf32>
    %c0_3 = arith.constant 0 : index
    %c0_4 = arith.constant 0 : index
    %5 = vector.load %arg6[%c0_3, %c0_4] : memref<32x128xf32, #tpu.memory_space<vmem>>, vector<32x128xf32>
    %6 = arith.addf %5, %4 : vector<32x128xf32>
    %c0_5 = arith.constant 0 : index
    %c0_6 = arith.constant 0 : index
    %7 = vector.load %arg6[%c0_5, %c0_6] : memref<32x128xf32, #tpu.memory_space<vmem>>, vector<32x128xf32>
    tpu.vector_store %arg6[%c0_5, %c0_6], %6 {strides = array<i32>} : memref<32x128xf32, #tpu.memory_space<vmem>>, vector<32x128xf32>,
    %c0_7 = arith.constant 0 : index
    %c0_8 = arith.constant 0 : index
    %8 = vector.load %arg7[%c0_7, %c0_8] : memref<32x128xf32, #tpu.memory_space<vmem>>, vector<32x128xf32>
    %9 = arith.maximumf %8, %4 : vector<32x128xf32>
    %c0_9 = arith.constant 0 : index
    %c0_10 = arith.constant 0 : index
    %10 = vector.load %arg7[%c0_9, %c0_10] : memref<32x128xf32, #tpu.memory_space<vmem>>, vector<32x128xf32>
    tpu.vector_store %arg7[%c0_9, %c0_10], %9 {strides = array<i32>} : memref<32x128xf32, #tpu.memory_space<vmem>>, vector<32x128xf32>,
    %c1_i32 = arith.constant 1 : i32
    %11 = arith.cmpi eq, %arg1, %c1_i32 : i32
    %12 = arith.extui %11 : i1 to i32
    %c0_i32_11 = arith.constant 0 : i32
    %13 = arith.cmpi ne, %12, %c0_i32_11 : i32
    scf.if %13 {
      %c0_12 = arith.constant 0 : index
      %c0_13 = arith.constant 0 : index
      %14 = vector.load %arg6[%c0_12, %c0_13] : memref<32x128xf32, #tpu.memory_space<vmem>>, vector<32x128xf32>
      %cst = arith.constant dense<0.000000e+00> : vector<32xf32>
      %15 = vector.multi_reduction <add>, %14, %cst [1] : vector<32x128xf32> to vector<32xf32>
      %16 = vector.shape_cast %15 : vector<32xf32> to vector<32x1xf32>
      %cst_14 = arith.constant 3.906250e-03 : f32
      %17 = vector.broadcast %cst_14 : f32 to vector<32x1xf32>
      %18 = arith.mulf %16, %17 : vector<32x1xf32>
      %c0_15 = arith.constant 0 : index
      %c0_16 = arith.constant 0 : index
      %19 = vector.load %arg7[%c0_15, %c0_16] : memref<32x128xf32, #tpu.memory_space<vmem>>, vector<32x128xf32>
      %cst_17 = arith.constant dense<0xFF800000> : vector<32xf32>
      %20 = vector.multi_reduction <maximumf>, %19, %cst_17 [1] : vector<32x128xf32> to vector<32xf32>
      %21 = vector.shape_cast %20 : vector<32xf32> to vector<32x1xf32>
      %22 = tpu.iota {dimensions = array<i32: 1>} : vector<32x2xi32>
      %c0_i32_18 = arith.constant 0 : i32
      %23 = vector.broadcast %c0_i32_18 : i32 to vector<32x2xi32>
      %24 = arith.cmpi eq, %22, %23 : vector<32x2xi32>
      %25 = vector.shape_cast %18 : vector<32x1xf32> to vector<32x1xf32>
      %26 = vector.broadcast %25 : vector<32x1xf32> to vector<32x2xf32>
      %27 = vector.shape_cast %21 : vector<32x1xf32> to vector<32x1xf32>
      %28 = vector.broadcast %27 : vector<32x1xf32> to vector<32x2xf32>
      %29 = arith.select %24, %26, %28 : vector<32x2xi1>, vector<32x2xf32>
      %c0_19 = arith.constant 0 : index
      %c0_20 = arith.constant 0 : index
      %30 = vector.load %arg3[%c0_19, %c0_20] : memref<2x32xf32, #tpu.memory_space<vmem>>, vector<2x32xf32>
      %c0_21 = arith.constant 0 : index
      %c0_22 = arith.constant 0 : index
      %31 = vector.load %arg4[%c0_21, %c0_22] : memref<32x2xf32, #tpu.memory_space<vmem>>, vector<32x2xf32>
      %cst_23 = arith.constant dense<0.000000e+00> : vector<2x2xf32>
      %32 = tpu.matmul %30, %29, %cst_23 {dimension_numbers = #tpu.dot_dimension_numbers<[1], [0], [0], [1], [0, 0, 1, 1], [], []>} : vector<2x32xf32>, vector<32x2xf32>, vector<2x2xf32> -> vector<2x2xf32>
      %cst_24 = arith.constant 0.000000e+00 : f32
      %33 = vector.broadcast %cst_24 : f32 to vector<2x2xf32>
      %34 = arith.maximumf %32, %33 : vector<2x2xf32>
      %cst_25 = arith.constant dense<0.000000e+00> : vector<32x2xf32>
      %35 = tpu.matmul %31, %34, %cst_25 {dimension_numbers = #tpu.dot_dimension_numbers<[1], [0], [0], [1], [0, 0, 1, 1], [], []>} : vector<32x2xf32>, vector<2x2xf32>, vector<32x2xf32> -> vector<32x2xf32>
      %36 = vector.extract_strided_slice %35 {offsets = [0, 0], sizes = [32, 1], strides = [1, 1]} : vector<32x2xf32> to vector<32x1xf32>
      %37 = vector.extract_strided_slice %35 {offsets = [0, 1], sizes = [32, 1], strides = [1, 1]} : vector<32x2xf32> to vector<32x1xf32>
      %38 = arith.addf %36, %37 : vector<32x1xf32>
      %39 = arith.negf %38 : vector<32x1xf32>
      %40 = math.exp %39 : vector<32x1xf32>
      %cst_26 = arith.constant 1.000000e+00 : f32
      %41 = vector.broadcast %cst_26 : f32 to vector<32x1xf32>
      %42 = arith.addf %41, %40 : vector<32x1xf32>
      %43 = arith.divf %41, %42 : vector<32x1xf32>
      %c0_27 = arith.constant 0 : index
      %c0_28 = arith.constant 0 : index
      %c0_29 = arith.constant 0 : index
      %44 = vector.load %arg5[%c0_27, %c0_28, %c0_29] : memref<1x32x1xf32, #tpu.memory_space<vmem>>, vector<1x32x1xf32>
      %45 = vector.shape_cast %44 : vector<1x32x1xf32> to vector<32x1xf32>
      %46 = vector.shape_cast %43 : vector<32x1xf32> to vector<1x32x1xf32>
      tpu.vector_store %arg5[%c0_27, %c0_28, %c0_29], %46 {strides = array<i32>} : memref<1x32x1xf32, #tpu.memory_space<vmem>>, vector<1x32x1xf32>,
    } else {
    }
    return
  }
  func.func @transform_0(%arg0: i32, %arg1: i32) -> (i32, i32, i32) {
    %c0_i32 = arith.constant 0 : i32
    %c0_i32_0 = arith.constant 0 : i32
    return %arg0, %c0_i32, %arg1 : i32, i32, i32
  }
  func.func @transform_1(%arg0: i32, %arg1: i32) -> (i32, i32) {
    %c0_i32 = arith.constant 0 : i32
    %c0_i32_0 = arith.constant 0 : i32
    %c0_i32_1 = arith.constant 0 : i32
    return %c0_i32, %c0_i32_0 : i32, i32
  }
  func.func @transform_2(%arg0: i32, %arg1: i32) -> (i32, i32) {
    %c0_i32 = arith.constant 0 : i32
    %c0_i32_0 = arith.constant 0 : i32
    %c0_i32_1 = arith.constant 0 : i32
    return %c0_i32, %c0_i32_0 : i32, i32
  }
  func.func @transform_3(%arg0: i32, %arg1: i32) -> (i32, i32, i32) {
    %c0_i32 = arith.constant 0 : i32
    %c0_i32_0 = arith.constant 0 : i32
    %c0_i32_1 = arith.constant 0 : i32
    return %arg0, %c0_i32, %c0_i32_0 : i32, i32, i32
  }
}

</mosaic_0001>

<llo_original>
// kernel: tpu_custom_call.1
$region0: #{tpu_custom_call.1}
  #allocation0 [shape = 'u32[]', space=smem, size = 0x4, offset = 0x4, fixed_abs, tag = 'smem constant byte address 0x4 - core index']
  #allocation1 [shape = 'u32[72,128]{1,0:T(1,128)}', space=vmem, size = 0x9000, scoped, tag = 'internal scratch']
  #allocation2 [shape = 'f32[32,128]{1,0:T(8,128)}', space=vmem, size = 0x4000, scoped, tag = 'scratch operand']
  #allocation3 [shape = 'f32[32,128]{1,0:T(8,128)}', space=vmem, size = 0x4000, scoped, tag = 'scratch operand']
  %s0 = inlined_call_operand.hbm [shape: f32[2,32,256], index: 0, kind: input, shape index: {}]
  %s1 = inlined_call_operand.vmem [shape: f32[2,32], index: 1, kind: input, shape index: {}]
  %s2 = inlined_call_operand.vmem [shape: f32[32,2], index: 2, kind: input, shape index: {}]
  %s3 = inlined_call_operand.vmem [shape: f32[2,32,1], index: 3, kind: output, shape index: {}]
  %s4 = sld [smem:[#allocation0]]
  $region57: #{tpu_custom_call.1} parent=0
    _
  %s6 = ssub.s32 1, %s4
  %s7 = scalar_select 0, %s6, %s4
  $region1: #{tpu_custom_call.1} parent=0
    #allocation4 [shape = 'u8[32768]{0}', space=vmem, size = 0x8000, scoped, tag = 'input window, operand 0']
    #allocation5 [shape = 's32[2]{0}', space=sflag, size = 0x8, scoped, tag = 'scoped memory for tpu_custom_call.1']
    %8 = vsyncpa [#allocation5], 0
    %s9 = scalar_lea.sflag [#allocation5], 1
    %10 = vsyncpa %s9, 0
    loop: start=0, step=1, limit=6
    $region2: #{tpu_custom_call.1} parent=1 // loop_pre_header
      _
    $region3: #{tpu_custom_call.1} parent=1 // loop_header
      %s12 = sphi 0, %s16
      %p13 = scmp.ge.s32.totalorder %s12, 6
      %s19 = sphi 0, %s31
      %s20 = sphi 0, %s27
      %s21 = sphi 0, %s19
      %s22 = sphi 0, %s20
      %s23 = sphi 0, %s21
      %s24 = sphi 0, %s22
      %s36 = sphi 0, %s38
      %s39 = sphi 0, %s36
      %s40 = sphi 0, %s39
      %s56 = sphi 0, %s40
      %s60 = sphi 0, %s60
      %s62 = sphi 0, %s60
      %s63 = sphi 0, %s62
      %s77 = sphi 0, %s63
      %s81 = sphi 0, %s81
      %s83 = sphi 0, %s81
      %s84 = sphi 0, %s83
      %s98 = sphi 0, %s84
      %s104 = sphi 0, %s106
      %s107 = sphi 0, %s104
      %s108 = sphi 0, %s107
      %s124 = sphi 0, %s108
    $region4: #{tpu_custom_call.1} parent=1 // loop_header_branch
      %15 = sbr.rel (%p13) target = $region8
    $region5: #{tpu_custom_call.1} parent=1 // loop_body
      %s17 = ssub.s32 %s12, 1
      %s18 = ssub.s32 %s12, 2
      %s25 = sadd.s32 1, %s20
      %p26 = scmp.ge.s32.totalorder %s25, 2
      %s27 = scalar_select %p26, 0, %s25
      %s28 = sadd.s32 1, %s19
      %s29 = scalar_select %p26, %s28, %s19
      %p30 = scmp.ge.s32.totalorder %s29, 2
      %s31 = scalar_select %p30, 0, %s29
      %s32 = ssub.s32 %s19, %s31
      %s33 = ssub.s32 %s20, %s27
      %s34 = sor.u32 %s32, %s33
      %p35 = scmp.eq.s32.totalorder %s34, 0
      %s37 = sadd.s32 %s36, 1
      %s38 = scalar_select %p35, %s36, %s37
      %p41 = pneg %p35
      %p42 = scmp.eq.s32.totalorder %s12, 3
      %p43 = por %p41, %p42
      %p44 = scmp.ne.s32.totalorder %s36, %s39
      %p45 = scmp.eq.s32.totalorder %s12, 0
      %p46 = por %p44, %p45
      %p47 = scmp.ne.s32.totalorder %s36, %s39
      %p48 = scmp.eq.s32.totalorder %s17, 3
      %p49 = por %p47, %p48
      %p50 = scmp.ne.s32.totalorder %s39, %s40
      %p51 = scmp.eq.s32.totalorder %s17, 0
      %p52 = por %p50, %p51
      %p53 = scmp.ne.s32.totalorder %s39, %s40
      %p54 = scmp.eq.s32.totalorder %s18, 3
      %p55 = por %p53, %p54
      %p57 = scmp.ne.s32.totalorder %s40, %s56
      %p58 = scmp.eq.s32.totalorder %s18, 0
      %p59 = por %p57, %p58
      %s61 = sadd.s32 %s60, 1
      %p64 = scmp.eq.s32.totalorder %s12, 3
      %p65 = scmp.ne.s32.totalorder %s60, %s62
      %p66 = scmp.eq.s32.totalorder %s12, 0
      %p67 = por %p65, %p66
      %p68 = scmp.ne.s32.totalorder %s60, %s62
      %p69 = scmp.eq.s32.totalorder %s17, 3
      %p70 = por %p68, %p69
      %p71 = scmp.ne.s32.totalorder %s62, %s63
      %p72 = scmp.eq.s32.totalorder %s17, 0
      %p73 = por %p71, %p72
      %p74 = scmp.ne.s32.totalorder %s62, %s63
      %p75 = scmp.eq.s32.totalorder %s18, 3
      %p76 = por %p74, %p75
      %p78 = scmp.ne.s32.totalorder %s63, %s77
      %p79 = scmp.eq.s32.totalorder %s18, 0
      %p80 = por %p78, %p79
      %s82 = sadd.s32 %s81, 1
      %p85 = scmp.eq.s32.totalorder %s12, 3
      %p86 = scmp.ne.s32.totalorder %s81, %s83
      %p87 = scmp.eq.s32.totalorder %s12, 0
      %p88 = por %p86, %p87
      %p89 = scmp.ne.s32.totalorder %s81, %s83
      %p90 = scmp.eq.s32.totalorder %s17, 3
      %p91 = por %p89, %p90
      %p92 = scmp.ne.s32.totalorder %s83, %s84
      %p93 = scmp.eq.s32.totalorder %s17, 0
      %p94 = por %p92, %p93
      %p95 = scmp.ne.s32.totalorder %s83, %s84
      %p96 = scmp.eq.s32.totalorder %s18, 3
      %p97 = por %p95, %p96
      %p99 = scmp.ne.s32.totalorder %s84, %s98
      %p100 = scmp.eq.s32.totalorder %s18, 0
      %p101 = por %p99, %p100
      %s102 = ssub.s32 %s19, %s31
      %p103 = scmp.eq.s32.totalorder %s102, 0
      %s105 = sadd.s32 %s104, 1
      %s106 = scalar_select %p103, %s104, %s105
      %p109 = pneg %p103
      %p110 = scmp.eq.s32.totalorder %s12, 3
      %p111 = por %p109, %p110
      %p112 = scmp.ne.s32.totalorder %s104, %s107
      %p113 = scmp.eq.s32.totalorder %s12, 0
      %p114 = por %p112, %p113
      %p115 = scmp.ne.s32.totalorder %s104, %s107
      %p116 = scmp.eq.s32.totalorder %s17, 3
      %p117 = por %p115, %p116
      %p118 = scmp.ne.s32.totalorder %s107, %s108
      %p119 = scmp.eq.s32.totalorder %s17, 0
      %p120 = por %p118, %p119
      %p121 = scmp.ne.s32.totalorder %s107, %s108
      %p122 = scmp.eq.s32.totalorder %s18, 3
      %p123 = por %p121, %p122
      %p125 = scmp.ne.s32.totalorder %s108, %s124
      %p126 = scmp.eq.s32.totalorder %s18, 0
      %p127 = por %p125, %p126
      %p128 = scmp.le.s32.totalorder 1, %s12
      %p129 = scmp.lt.s32.totalorder %s12, 5
      %p130 = pnand %p128, %p129
      %p131 = pneg %p130
      // Predicated region
      $region9: #{tpu_custom_call.1} parent=5 // pred_check
        _
      $region10: #{tpu_custom_call.1} parent=5 // pred_check_branch
        %133 = sbr.rel (%p130) target = $region12
      $region11: #{tpu_custom_call.1} parent=5 // pred_region
        %s134 = ssub.s32 %s12, 1
        // Predicated region
        $region13: #{tpu_custom_call.1} parent=11 // pred_check
          %p135 = pneg %p73
        $region14: #{tpu_custom_call.1} parent=11 // pred_check_branch
          %137 = sbr.rel (%p135) target = $region16
        $region15: #{tpu_custom_call.1} parent=11 // pred_region
          _
        $region16: #{tpu_custom_call.1} parent=11 // pred_fallthru
          _
        // Predicated region
        $region17: #{tpu_custom_call.1} parent=11 // pred_check
          %p138 = pneg %p94
        $region18: #{tpu_custom_call.1} parent=11 // pred_check_branch
          %140 = sbr.rel (%p138) target = $region20
        $region19: #{tpu_custom_call.1} parent=11 // pred_region
          _
        $region20: #{tpu_custom_call.1} parent=11 // pred_fallthru
          _
      $region12: #{tpu_custom_call.1} parent=5 // pred_fallthru
        _
      %p141 = scmp.lt.s32.totalorder %s12, 4
      // Predicated region
      $region21: #{tpu_custom_call.1} parent=5 // pred_check
        %p142 = pneg %p141
      $region22: #{tpu_custom_call.1} parent=5 // pred_check_branch
        %144 = sbr.rel (%p142) target = $region24
      $region23: #{tpu_custom_call.1} parent=5 // pred_region
        // Predicated region
        $region25: #{tpu_custom_call.1} parent=23 // pred_check
          %p145 = pneg %p46
        $region26: #{tpu_custom_call.1} parent=23 // pred_check_branch
          %147 = sbr.rel (%p145) target = $region28
        $region27: #{tpu_custom_call.1} parent=23 // pred_region
          %s148 = sand.u32 %s36, 1
          %s149 = scalar_lea.sflag [#allocation5], %s148
          %s150 = sand.u32 %s36, 1
          %s151 = smul.addr %s150, 32
          %s152 = scalar_lea.vmem [#allocation4], %s151
          %154 = vsyncadd %s149, 0
          %s155 = smul.addr %s19, 8
          %s156 = sadd.s32 %s20, %s155
          %s157 = smul.addr %s156, 8
          %s158 = scalar_lea.hbm %s0, %s157
          %s159 = sshll.u32 %s158, 4
          %s160 = int_to_ptr.hbm [resolvable:$true] %s159
          %s161 = sshll.u32 %s152, 4
          %s162 = int_to_ptr.vmem [resolvable:$true] %s161
          %167 = dma.hbm_to_vmem [thread:$0]  %s160, 512, %s162, %s149, 256, 128, 8
        $region28: #{tpu_custom_call.1} parent=23 // pred_fallthru
          _
      $region24: #{tpu_custom_call.1} parent=5 // pred_fallthru
        _
      %p168 = scmp.le.s32.totalorder 1, %s12
      %p169 = scmp.lt.s32.totalorder %s12, 5
      %p170 = pnand %p168, %p169
      %p171 = pneg %p170
      // Predicated region
      $region29: #{tpu_custom_call.1} parent=5 // pred_check
        _
      $region30: #{tpu_custom_call.1} parent=5 // pred_check_branch
        %173 = sbr.rel (%p170) target = $region32
      $region31: #{tpu_custom_call.1} parent=5 // pred_region
        %s174 = ssub.s32 %s12, 1
        %s175 = sand.u32 %s39, 1
        %s176 = scalar_lea.sflag [#allocation5], %s175
        %s177 = sand.u32 %s39, 1
        %s178 = smul.addr %s177, 32
        %s179 = scalar_lea.vmem [#allocation4], %s178
        // Predicated region
        $region33: #{tpu_custom_call.1} parent=31 // pred_check
          %p180 = pneg %p52
        $region34: #{tpu_custom_call.1} parent=31 // pred_check_branch
          %182 = sbr.rel (%p180) target = $region36
        $region35: #{tpu_custom_call.1} parent=31 // pred_region
          %184 = dma.done %s176, 512
        $region36: #{tpu_custom_call.1} parent=31 // pred_fallthru
          _
        %s185 = sand.u32 %s39, 1
        %s186 = scalar_lea.sflag [#allocation5], %s185
        %s187 = sand.u32 %s39, 1
        %s188 = smul.addr %s187, 32
        %s189 = scalar_lea.vmem [#allocation4], %s188
        %p190 = pneg %p52
        %p191 = pneg %p49
        %p192 = pneg %p73
        %p193 = pneg %p70
        %p194 = pneg %p94
        %p195 = pneg %p91
        %p196 = pneg %p120
        %p197 = pneg %p117
        %p198 = scmp.lt.s32.totalorder %s21, 1
        %s199 = scalar_select %p198, %s21, 1
        %s200 = smul.addr %s199, 4
        %s201 = smul.addr %s200, 8
        %s202 = scalar_lea.vmem %s3, %s201
        %p203 = scmp.lt.s32.totalorder %s21, 1
        %s204 = scalar_select %p203, %s21, 1
        %s205 = smul.addr %s204, 4
        %s206 = smul.addr %s205, 8
        %s207 = scalar_lea.vmem %s3, %s206
        %p208 = scmp.eq.s32.totalorder %s22, 0
        // Predicated region
        $region37: #{tpu_custom_call.1} parent=31 // pred_check
          %p209 = pneg %p208
        $region38: #{tpu_custom_call.1} parent=31 // pred_check_branch
          %211 = sbr.rel (%p209) target = $region40
        $region39: #{tpu_custom_call.1} parent=31 // pred_region
          %212 = vst [vmem:[#allocation2] sm:$0xff] 0.0
          %213 = vst [vmem:[#allocation2 + $0x8] sm:$0xff] 0.0
          %214 = vst [vmem:[#allocation2 + $0x10] sm:$0xff] 0.0
          %215 = vst [vmem:[#allocation2 + $0x18] sm:$0xff] 0.0
          %216 = vst [vmem:[#allocation3] sm:$0xff] -inf
          %217 = vst [vmem:[#allocation3 + $0x8] sm:$0xff] -inf
          %218 = vst [vmem:[#allocation3 + $0x10] sm:$0xff] -inf
          %219 = vst [vmem:[#allocation3 + $0x18] sm:$0xff] -inf
        $region40: #{tpu_custom_call.1} parent=31 // pred_fallthru
          _
        %v220 = vld [vmem:[%s179] sm:$0xff]
        %v221 = vld [vmem:[%s179 + $0x8] sm:$0xff]
        %v222 = vld [vmem:[%s179 + $0x10] sm:$0xff]
        %v223 = vld [vmem:[%s179 + $0x18] sm:$0xff]
        %v224 = vld [vmem:[#allocation2] sm:$0xff]
        %v225 = vld [vmem:[#allocation2 + $0x8] sm:$0xff]
        %v226 = vld [vmem:[#allocation2 + $0x10] sm:$0xff]
        %v227 = vld [vmem:[#allocation2 + $0x18] sm:$0xff]
        %v228 = vadd.f32 %v224, %v220
        %v229 = vadd.f32 %v225, %v221
        %v230 = vadd.f32 %v226, %v222
        %v231 = vadd.f32 %v227, %v223
        %232 = vst [vmem:[#allocation2] sm:$0xff] %v228
        %233 = vst [vmem:[#allocation2 + $0x8] sm:$0xff] %v229
        %234 = vst [vmem:[#allocation2 + $0x10] sm:$0xff] %v230
        %235 = vst [vmem:[#allocation2 + $0x18] sm:$0xff] %v231
        %v236 = vld [vmem:[#allocation3] sm:$0xff]
        %v237 = vld [vmem:[#allocation3 + $0x8] sm:$0xff]
        %v238 = vld [vmem:[#allocation3 + $0x10] sm:$0xff]
        %v239 = vld [vmem:[#allocation3 + $0x18] sm:$0xff]
        %v240 = vmax.f32 %v236, %v220
        %v241 = vmax.f32 %v237, %v221
        %v242 = vmax.f32 %v238, %v222
        %v243 = vmax.f32 %v239, %v223
        %244 = vst [vmem:[#allocation3] sm:$0xff] %v240
        %245 = vst [vmem:[#allocation3 + $0x8] sm:$0xff] %v241
        %246 = vst [vmem:[#allocation3 + $0x10] sm:$0xff] %v242
        %247 = vst [vmem:[#allocation3 + $0x18] sm:$0xff] %v243
        %p248 = scmp.eq.s32.totalorder %s22, 1
        // Predicated region
        $region41: #{tpu_custom_call.1} parent=31 // pred_check
          %p249 = pneg %p248
        $region42: #{tpu_custom_call.1} parent=31 // pred_check_branch
          %251 = sbr.rel (%p249) target = $region44
        $region43: #{tpu_custom_call.1} parent=31 // pred_region
          %v252 = vld [vmem:[#allocation2] sm:$0xff]
          %v253 = vld [vmem:[#allocation2 + $0x8] sm:$0xff]
          %v254 = vld [vmem:[#allocation2 + $0x10] sm:$0xff]
          %v255 = vld [vmem:[#allocation2 + $0x18] sm:$0xff]
          %256 = vadd.xlane.f32.xlu0 %v252
          %v257 = vpop.xlane.xlu0 %256
          %258 = vadd.xlane.f32.xlu0 %v253
          %v259 = vpop.xlane.xlu0 %258
          %260 = vadd.xlane.f32.xlu0 %v254
          %v261 = vpop.xlane.xlu0 %260
          %262 = vadd.xlane.f32.xlu0 %v255
          %v263 = vpop.xlane.xlu0 %262
          %v264 = vmul.f32 %v257, 0.00390625
          %v265 = vmul.f32 %v259, 0.00390625
          %v266 = vmul.f32 %v261, 0.00390625
          %v267 = vmul.f32 %v263, 0.00390625
          %v268 = vld [vmem:[#allocation3] sm:$0xff]
          %v269 = vld [vmem:[#allocation3 + $0x8] sm:$0xff]
          %v270 = vld [vmem:[#allocation3 + $0x10] sm:$0xff]
          %v271 = vld [vmem:[#allocation3 + $0x18] sm:$0xff]
          %272 = vmax.xlane.f32.xlu0 %v268
          %v273 = vpop.xlane.xlu0 %272
          %274 = vmax.xlane.f32.xlu0 %v269
          %v275 = vpop.xlane.xlu0 %274
          %276 = vmax.xlane.f32.xlu0 %v270
          %v277 = vpop.xlane.xlu0 %276
          %278 = vmax.xlane.f32.xlu0 %v271
          %v279 = vpop.xlane.xlu0 %278
          %v280 = vlaneseq
          %v281 = vand.u32 %v280, 127
          %vm282 = vcmp.eq.s32.totalorder %v281, 0
          %v283 = vsel %vm282, %v264, %v273
          %v284 = vsel %vm282, %v265, %v275
          %v285 = vsel %vm282, %v266, %v277
          %v286 = vsel %vm282, %v267, %v279
          %v287 = vld [vmem:[%s1] sm:$0x3]
          %v288 = vld [vmem:[%s2] sm:$0xff]
          %v289 = vld [vmem:[%s2 + $0x8] sm:$0xff]
          %v290 = vld [vmem:[%s2 + $0x10] sm:$0xff]
          %v291 = vld [vmem:[%s2 + $0x18] sm:$0xff]
          %vm292 = vcmask 261120
          %v294 = vsel %vm292, %v287, 0
          %296 = vmatpush.msra.mxu0 0.0
          %297 = vmatpush.msra.mxu0 0.0
          %298 = vmatpush.msra.mxu0 0.0
          %299 = vmatpush.msra.mxu0 0.0
          %300 = vmatpush.msra.mxu0 0.0
          %301 = vmatpush.msra.mxu0 0.0
          %302 = vmatpush.msra.mxu0 0.0
          %303 = vmatpush.msra.mxu0 0.0
          %304 = vmatpush.msra.mxu0 0.0
          %305 = vmatpush.msra.mxu0 0.0
          %306 = vmatpush.msra.mxu0 0.0
          %307 = vmatpush.msra.mxu0 0.0
          %308 = vmatpush.msra.mxu0 %v286
          %309 = vmatpush.msra.mxu0 %v285
          %310 = vmatpush.msra.mxu0 %v284
          %311 = vmatpush.msra.mxu0 %v283
          %312 = vmatmul.f32.gmra.mxu0 %v294
          %v313 = vpop.f32.mrf.mxu0
          %v314 = vadd.f32 0.0, %v313
          %315 = vdwg.mxu0
          %v316 = vmax.f32 %v314, 0.0
          %vm317 = vcmask 15360
          %v319 = vsel %vm317, %v288, 0
          %v322 = vsel %vm317, %v289, 0
          %v325 = vsel %vm317, %v290, 0
          %v328 = vsel %vm317, %v291, 0
          %vm330 = vcmask 1041408
          %v332 = vsel %vm330, %v316, 0
          %334 = vmatpush.msra.mxu0 0.0
          %335 = vmatpush.msra.mxu0 0.0
          %336 = vmatpush.msra.mxu0 0.0
          %337 = vmatpush.msra.mxu0 0.0
          %338 = vmatpush.msra.mxu0 0.0
          %339 = vmatpush.msra.mxu0 0.0
          %340 = vmatpush.msra.mxu0 0.0
          %341 = vmatpush.msra.mxu0 0.0
          %342 = vmatpush.msra.mxu0 0.0
          %343 = vmatpush.msra.mxu0 0.0
          %344 = vmatpush.msra.mxu0 0.0
          %345 = vmatpush.msra.mxu0 0.0
          %346 = vmatpush.msra.mxu0 0.0
          %347 = vmatpush.msra.mxu0 0.0
          %348 = vmatpush.msra.mxu0 0.0
          %349 = vmatpush.msra.mxu0 %v332
          %350 = vmatmul.f32.gmra.mxu0 %v319
          %v351 = vpop.f32.mrf.mxu0
          %v352 = vadd.f32 0.0, %v351
          %353 = vmatmul.f32.gmra.mxu0 %v322
          %v354 = vpop.f32.mrf.mxu0
          %v355 = vadd.f32 0.0, %v354
          %356 = vmatmul.f32.gmra.mxu0 %v325
          %v357 = vpop.f32.mrf.mxu0
          %v358 = vadd.f32 0.0, %v357
          %359 = vmatmul.f32.gmra.mxu0 %v328
          %v360 = vpop.f32.mrf.mxu0
          %v361 = vadd.f32 0.0, %v360
          %362 = vdwg.mxu0
          %367 = vrot.lane.b32.xlu0 %v352, 127
          %v368 = vpop.permute.xlu0 %367
          %369 = vrot.lane.b32.xlu0 %v355, 127
          %v370 = vpop.permute.xlu0 %369
          %371 = vrot.lane.b32.xlu0 %v358, 127
          %v372 = vpop.permute.xlu0 %371
          %373 = vrot.lane.b32.xlu0 %v361, 127
          %v374 = vpop.permute.xlu0 %373
          %v379 = vadd.f32 %v352, %v368
          %v380 = vadd.f32 %v355, %v370
          %v381 = vadd.f32 %v358, %v372
          %v382 = vadd.f32 %v361, %v374
          %v383 = vxor.u32 %v379, 2147483648
          %v384 = vxor.u32 %v380, 2147483648
          %v385 = vxor.u32 %v381, 2147483648
          %v386 = vxor.u32 %v382, 2147483648
          %v387 = vmul.f32 %v383, 1.442695
          %v388 = vpow.pop %v387
          %v389 = vmul.f32 %v384, 1.442695
          %v390 = vpow.pop %v389
          %v391 = vmul.f32 %v385, 1.442695
          %v392 = vpow.pop %v391
          %v393 = vmul.f32 %v386, 1.442695
          %v394 = vpow.pop %v393
          %v395 = vadd.f32 %v388, 1.0
          %v396 = vadd.f32 %v390, 1.0
          %v397 = vadd.f32 %v392, 1.0
          %v398 = vadd.f32 %v394, 1.0
          %v399 = vrcp.pop %v395
          %v400 = vmul.f32 %v395, %v399
          %v401 = vsub.f32 1.0, %v400
          %v402 = vmul.f32 %v399, %v401
          %v403 = vadd.f32 %v399, %v402
          %vm404 = vweird.f32 %v395
          %vm405 = vweird.f32 %v399
          %vm406 = vmor %vm404, %vm405
          %v407 = vsel %vm406, %v399, %v403
          %v408 = vand.u32 2147483647, %v395
          %vm409 = vcmp.eq.f32.partialorder %v408, 8.507059e+37
          %v410 = vand.u32 %v395, 2147483648
          %v411 = vor.u32 1.1754944e-38, %v410
          %v412 = vsel %vm409, %v411, %v407
          %v413 = vmul.f32 1.0, %v412
          %v414 = vrcp.pop %v396
          %v415 = vmul.f32 %v396, %v414
          %v416 = vsub.f32 1.0, %v415
          %v417 = vmul.f32 %v414, %v416
          %v418 = vadd.f32 %v414, %v417
          %vm419 = vweird.f32 %v396
          %vm420 = vweird.f32 %v414
          %vm421 = vmor %vm419, %vm420
          %v422 = vsel %vm421, %v414, %v418
          %v423 = vand.u32 2147483647, %v396
          %vm424 = vcmp.eq.f32.partialorder %v423, 8.507059e+37
          %v425 = vand.u32 %v396, 2147483648
          %v426 = vor.u32 1.1754944e-38, %v425
          %v427 = vsel %vm424, %v426, %v422
          %v428 = vmul.f32 1.0, %v427
          %v429 = vrcp.pop %v397
          %v430 = vmul.f32 %v397, %v429
          %v431 = vsub.f32 1.0, %v430
          %v432 = vmul.f32 %v429, %v431
          %v433 = vadd.f32 %v429, %v432
          %vm434 = vweird.f32 %v397
          %vm435 = vweird.f32 %v429
          %vm436 = vmor %vm434, %vm435
          %v437 = vsel %vm436, %v429, %v433
          %v438 = vand.u32 2147483647, %v397
          %vm439 = vcmp.eq.f32.partialorder %v438, 8.507059e+37
          %v440 = vand.u32 %v397, 2147483648
          %v441 = vor.u32 1.1754944e-38, %v440
          %v442 = vsel %vm439, %v441, %v437
          %v443 = vmul.f32 1.0, %v442
          %v444 = vrcp.pop %v398
          %v445 = vmul.f32 %v398, %v444
          %v446 = vsub.f32 1.0, %v445
          %v447 = vmul.f32 %v444, %v446
          %v448 = vadd.f32 %v444, %v447
          %vm449 = vweird.f32 %v398
          %vm450 = vweird.f32 %v444
          %vm451 = vmor %vm449, %vm450
          %v452 = vsel %vm451, %v444, %v448
          %v453 = vand.u32 2147483647, %v398
          %vm454 = vcmp.eq.f32.partialorder %v453, 8.507059e+37
          %v455 = vand.u32 %v398, 2147483648
          %v456 = vor.u32 1.1754944e-38, %v455
          %v457 = vsel %vm454, %v456, %v452
          %v458 = vmul.f32 1.0, %v457
          %vm459 = vcmask 7168
          %460 = vst.msk [vmem:[%s207] sm:$0xff] %vm459, %v413
          %461 = vst.msk [vmem:[%s207 + $0x8] sm:$0xff] %vm459, %v428
          %462 = vst.msk [vmem:[%s207 + $0x10] sm:$0xff] %vm459, %v443
          %463 = vst.msk [vmem:[%s207 + $0x18] sm:$0xff] %vm459, %v458
        $region44: #{tpu_custom_call.1} parent=31 // pred_fallthru
          _
        %p464 = scmp.lt.s32.totalorder %s21, 1
        %s465 = scalar_select %p464, %s21, 1
        %s466 = smul.addr %s465, 4
        %s467 = smul.addr %s466, 8
        %s468 = scalar_lea.vmem %s3, %s467
        // Predicated region
        $region45: #{tpu_custom_call.1} parent=31 // pred_check
          %p469 = pneg %p117
        $region46: #{tpu_custom_call.1} parent=31 // pred_check_branch
          %471 = sbr.rel (%p469) target = $region48
        $region47: #{tpu_custom_call.1} parent=31 // pred_region
          _
        $region48: #{tpu_custom_call.1} parent=31 // pred_fallthru
          _
      $region32: #{tpu_custom_call.1} parent=5 // pred_fallthru
        _
      %p472 = scmp.le.s32.totalorder 2, %s12
      // Predicated region
      $region49: #{tpu_custom_call.1} parent=5 // pred_check
        %p473 = pneg %p472
      $region50: #{tpu_custom_call.1} parent=5 // pred_check_branch
        %475 = sbr.rel (%p473) target = $region52
      $region51: #{tpu_custom_call.1} parent=5 // pred_region
        %s476 = ssub.s32 %s12, 2
        // Predicated region
        $region53: #{tpu_custom_call.1} parent=51 // pred_check
          %p477 = pneg %p123
        $region54: #{tpu_custom_call.1} parent=51 // pred_check_branch
          %479 = sbr.rel (%p477) target = $region56
        $region55: #{tpu_custom_call.1} parent=51 // pred_region
          %p480 = scmp.lt.s32.totalorder %s23, 1
          %s481 = scalar_select %p480, %s23, 1
          %s482 = smul.addr %s481, 4
          %s483 = smul.addr %s482, 8
          %s484 = scalar_lea.vmem %s3, %s483
        $region56: #{tpu_custom_call.1} parent=51 // pred_fallthru
          _
      $region52: #{tpu_custom_call.1} parent=5 // pred_fallthru
        _
    $region6: #{tpu_custom_call.1} parent=1 // loop_footer
      %s16 = sadd.s32 1, %s12
    $region7: #{tpu_custom_call.1} parent=1 // loop_footer_branch
      %11 = sbr.rel target = $region3
    $region8: #{tpu_custom_call.1} parent=1 // loop_exit
      _
    %485 = vsyncpa [#allocation5], 1
    %s486 = scalar_lea.sflag [#allocation5], 1
    %487 = vsyncpa %s486, 1

</llo_original>
